<compile_context>
chip_gen: v5e
topology: v5e:2x2
jax: 0.10.0
libtpu: 0.0.40
codegen_flags: <defaults>
</compile_context>

<pallas_src>
import functools

import jax
import jax.numpy as jnp
from jax import lax
from jax.experimental import pallas as pl
from jax.experimental.pallas import tpu as pltpu


def _round_up(a, b):
    return (a + b - 1) // b * b


def _batch_hard_kernel(x_row_ref, x_col_ref, t_row_ref, t_col_ref,
                       loss_ref, corr_ref, max_sq_ref, min_sq_ref,
                       *, margin, n_valid):
    i = pl.program_id(0)            # row-tile index (parallel)
    j = pl.program_id(1)            # col-tile index (reduction, last axis)
    n_j = pl.num_programs(1)

    tm = x_row_ref.shape[0]
    tn = x_col_ref.shape[0]

    @pl.when(j == 0)
    def _():
        max_sq_ref[...] = jnp.full_like(max_sq_ref, -jnp.inf)
        min_sq_ref[...] = jnp.full_like(min_sq_ref, jnp.inf)

    xr = x_row_ref[...].astype(jnp.float32)                      # (tm, D)
    xc = x_col_ref[...].astype(jnp.float32)                      # (tn, D)

    # Gram tile on the MXU without materialising x.T: contract D directly.
    gram = lax.dot_general(xr, xc,
                           dimension_numbers=(((1,), (1,)), ((), ())),
                           preferred_element_type=jnp.float32)   # (tm, tn)

    sq_r = jnp.sum(xr * xr, axis=1, keepdims=True)               # (tm, 1)
    sq_c = jnp.sum(xc * xc, axis=1, keepdims=True).T             # (1, tn)

    # Squared pairwise distances for this tile (sqrt deferred to finalise).
    dist2 = sq_r + sq_c - 2.0 * gram                             # (tm, tn)

    same = t_row_ref[...] == t_col_ref[...]                      # (tm, tn)

    # Mask out padded columns (batch padded up to a tile multiple).
    col_idx = lax.broadcasted_iota(jnp.int32, (1, tn), 1) + j * tn
    col_valid = col_idx < n_valid                                # (1, tn)

    pos = jnp.where(jnp.logical_and(same, col_valid), dist2, -jnp.inf)
    neg = jnp.where(jnp.logical_and(jnp.logical_not(same), col_valid),
                    dist2, jnp.inf)

    max_sq_ref[...] = jnp.maximum(max_sq_ref[...],
                                  jnp.max(pos, axis=1, keepdims=True))
    min_sq_ref[...] = jnp.minimum(min_sq_ref[...],
                                  jnp.min(neg, axis=1, keepdims=True))

    @pl.when(j == n_j - 1)
    def _():
        # sqrt/clip only on the reduced (tm, 1) values (EUP work: 2N not N^2).
        dist_ap = jnp.sqrt(jnp.clip(max_sq_ref[...], 1e-12, None))
        dist_an = jnp.sqrt(jnp.clip(min_sq_ref[...], 1e-12, None))
        diff = dist_an - dist_ap
        if margin == 0:
            # SoftMarginLoss with y = 1: log(1 + exp(-diff))
            per_sample = jnp.logaddexp(jnp.float32(0.0), -diff)
        else:
            # MarginRankingLoss with y = 1: relu(margin - diff)
            per_sample = jnp.maximum(jnp.float32(margin) - diff, 0.0)

        row_idx = lax.broadcasted_iota(jnp.int32, (tm, 1), 0) + i * tm
        row_valid = row_idx < n_valid
        loss_ref[...] = jnp.where(row_valid, per_sample,
                                  0.0).astype(jnp.float32)
        corr_ref[...] = jnp.where(
            jnp.logical_and(row_valid, dist_an > dist_ap),
            1.0, 0.0).astype(jnp.float32)


def uiidcl_batch_hard(inputs, targets, margin=0):
    """Pallas equivalent of UIIDCL_BatchHard.forward -> (loss, prec, N)."""
    n, d = inputs.shape

    # MXU-friendly tile sizes; tiny batches run as one (8-multiple) block.
    if n >= 256:
        blk = 256
    elif n >= 128:
        blk = 128
    else:
        blk = _round_up(n, 8)
    n_pad = _round_up(n, blk)
    g = n_pad // blk

    x = inputs                               # native dtype; cast per tile
    t = targets.astype(jnp.int32)
    if n_pad != n:
        x = jnp.pad(x, ((0, n_pad - n), (0, 0)))
        t = jnp.pad(t, (0, n_pad - n), constant_values=-1)
    t_row = t.reshape(n_pad, 1)
    t_col = t.reshape(1, n_pad)              # lane-major label copy

    kernel = functools.partial(_batch_hard_kernel, margin=margin, n_valid=n)

    itemsize = jnp.dtype(x.dtype).itemsize
    cost = pl.CostEstimate(
        flops=2 * n_pad * n_pad * d + 8 * n_pad * n_pad,
        transcendentals=4 * n_pad,
        bytes_accessed=2 * g * n_pad * d * itemsize
                       + 2 * g * n_pad * 4 + 2 * n_pad * 4,
    )

    loss_ps, corr_ps = pl.pallas_call(
        kernel,
        out_shape=(
            jax.ShapeDtypeStruct((n_pad, 1), jnp.float32),  # per-sample loss
            jax.ShapeDtypeStruct((n_pad, 1), jnp.float32),  # per-sample an>ap
        ),
        grid_spec=pltpu.PrefetchScalarGridSpec(
            num_scalar_prefetch=0,
            grid=(g, g),
            in_specs=[
                pl.BlockSpec((blk, d), lambda i, j: (i, 0)),   # x row tile
                pl.BlockSpec((blk, d), lambda i, j: (j, 0)),   # x col tile
                pl.BlockSpec((blk, 1), lambda i, j: (i, 0)),   # row labels
                pl.BlockSpec((1, blk), lambda i, j: (0, j)),   # col labels
            ],
            out_specs=(
                pl.BlockSpec((blk, 1), lambda i, j: (i, 0)),
                pl.BlockSpec((blk, 1), lambda i, j: (i, 0)),
            ),
            scratch_shapes=[
                pltpu.VMEM((blk, 1), jnp.float32),  # running max dist^2 (pos)
                pltpu.VMEM((blk, 1), jnp.float32),  # running min dist^2 (neg)
            ],
        ),
        compiler_params=pltpu.CompilerParams(
            dimension_semantics=("parallel", "arbitrary"),
            vmem_limit_bytes=32 * 1024 * 1024,
        ),
        cost_estimate=cost,
    )(x, x, t_row, t_col)

    loss = jnp.sum(loss_ps) / jnp.float32(n)
    prec = jnp.sum(corr_ps) / jnp.float32(n)
    return loss, prec, n


def _reference(inputs, targets, margin=0):
    # Pure-JAX reference mirroring the PyTorch module.
    x = inputs.astype(jnp.float32)
    n = x.shape[0]
    sq = jnp.sum(x * x, axis=1, keepdims=True)
    gram = jnp.dot(x, x.T, precision=jax.lax.Precision.HIGHEST)
    dist = jnp.sqrt(jnp.clip(sq + sq.T - 2.0 * gram, 1e-12, None))
    same = targets[:, None] == targets[None, :]
    dist_ap = jnp.max(jnp.where(same, dist, -jnp.inf), axis=1)
    dist_an = jnp.min(jnp.where(same, jnp.inf, dist), axis=1)
    diff = dist_an - dist_ap
    if margin == 0:
        loss = jnp.mean(jnp.logaddexp(0.0, -diff))
    else:
        loss = jnp.mean(jnp.maximum(margin - diff, 0.0))
    prec = jnp.mean((dist_an > dist_ap).astype(jnp.float32))
    return loss, prec, n


if __name__ == "__main__":
    key = jax.random.PRNGKey(0)

    # Case 1: tiny batch, soft-margin loss (margin == 0).
    N, D = 8, 32
    x = jax.random.normal(key, (N, D), dtype=jnp.float32)
    targets = jnp.array([0, 0, 1, 1, 2, 2, 3, 3], dtype=jnp.int32)
    loss, prec, bs = uiidcl_batch_hard(x, targets, margin=0)
    jax.block_until_ready((loss, prec))
    ref_loss, ref_prec, _ = _reference(x, targets, margin=0)
    assert bs == N
    assert jnp.allclose(loss, ref_loss, atol=1e-5), (loss, ref_loss)
    assert jnp.allclose(prec, ref_prec, atol=1e-6), (prec, ref_prec)

    # Case 2: same data, hard margin (MarginRankingLoss branch).
    loss_m, prec_m, _ = uiidcl_batch_hard(x, targets, margin=0.3)
    jax.block_until_ready((loss_m, prec_m))
    ref_loss_m, ref_prec_m, _ = _reference(x, targets, margin=0.3)
    assert jnp.allclose(loss_m, ref_loss_m, atol=1e-5), (loss_m, ref_loss_m)
    assert jnp.allclose(prec_m, ref_prec_m, atol=1e-6), (prec_m, ref_prec_m)

    # Case 3: batch that is not a tile multiple -> exercises the multi-tile
    # running max/min, padding masks and the (2, 2) grid.
    N2, D2 = 136, 32
    key2 = jax.random.PRNGKey(0)
    x2 = jax.random.normal(key2, (N2, D2), dtype=jnp.float32)
    targets2 = (jnp.arange(N2, dtype=jnp.int32) % 17)
    loss2, prec2, bs2 = uiidcl_batch_hard(x2, targets2, margin=0)
    jax.block_until_ready((loss2, prec2))
    ref_loss2, ref_prec2, _ = _reference(x2, targets2, margin=0)
    assert bs2 == N2
    assert jnp.allclose(loss2, ref_loss2, atol=1e-4, rtol=1e-4), (loss2, ref_loss2)
    assert jnp.allclose(prec2, ref_prec2, atol=1e-6), (prec2, ref_prec2)

    print("KERNEL_OK")
</pallas_src>

<mosaic_0001>
module attributes {stable_mosaic.version = 11 : i64} {
  func.func @_batch_hard_kernel(%arg0: i32, %arg1: i32, %arg2: memref<8x32xf32, #tpu.memory_space<vmem>>, %arg3: memref<8x32xf32, #tpu.memory_space<vmem>>, %arg4: memref<8x1xi32, #tpu.memory_space<vmem>>, %arg5: memref<1x8xi32, #tpu.memory_space<vmem>>, %arg6: memref<8x1xf32, #tpu.memory_space<vmem>>, %arg7: memref<8x1xf32, #tpu.memory_space<vmem>>, %arg8: memref<8x1xf32, #tpu.memory_space<vmem>>, %arg9: memref<8x1xf32, #tpu.memory_space<vmem>>) attributes {dimension_semantics = [#tpu.dimension_semantics<parallel>, #tpu.dimension_semantics<arbitrary>], iteration_bounds = array<i64: 1, 1>, scalar_prefetch = 0 : i64, scratch_operands = 2 : i64, tpu.core_type = #tpu.core_type<tc>, window_params = [{transform_indices = @transform_0, window_bounds = array<i64: 8, 32>}, {transform_indices = @transform_1, window_bounds = array<i64: 8, 32>}, {transform_indices = @transform_2, window_bounds = array<i64: 8, 1>}, {transform_indices = @transform_3, window_bounds = array<i64: 1, 8>}, {transform_indices = @transform_4, window_bounds = array<i64: 8, 1>}, {transform_indices = @transform_5, window_bounds = array<i64: 8, 1>}]} {
    %c0_i32 = arith.constant 0 : i32
    %0 = arith.cmpi eq, %arg1, %c0_i32 : i32
    %1 = arith.extui %0 : i1 to i32
    %c0_i32_0 = arith.constant 0 : i32
    %2 = arith.cmpi ne, %1, %c0_i32_0 : i32
    scf.if %2 {
      %cst_27 = arith.constant 0xFF800000 : f32
      %52 = vector.broadcast %cst_27 : f32 to vector<8x1xf32>
      %c0_28 = arith.constant 0 : index
      %c0_29 = arith.constant 0 : index
      %53 = vector.load %arg8[%c0_28, %c0_29] : memref<8x1xf32, #tpu.memory_space<vmem>>, vector<8x1xf32>
      tpu.vector_store %arg8[%c0_28, %c0_29], %52 {strides = array<i32>} : memref<8x1xf32, #tpu.memory_space<vmem>>, vector<8x1xf32>,
      %cst_30 = arith.constant 0x7F800000 : f32
      %54 = vector.broadcast %cst_30 : f32 to vector<8x1xf32>
      %c0_31 = arith.constant 0 : index
      %c0_32 = arith.constant 0 : index
      %55 = vector.load %arg9[%c0_31, %c0_32] : memref<8x1xf32, #tpu.memory_space<vmem>>, vector<8x1xf32>
      tpu.vector_store %arg9[%c0_31, %c0_32], %54 {strides = array<i32>} : memref<8x1xf32, #tpu.memory_space<vmem>>, vector<8x1xf32>,
    } else {
    }
    %c0 = arith.constant 0 : index
    %c0_1 = arith.constant 0 : index
    %3 = vector.load %arg2[%c0, %c0_1] : memref<8x32xf32, #tpu.memory_space<vmem>>, vector<8x32xf32>
    %c0_2 = arith.constant 0 : index
    %c0_3 = arith.constant 0 : index
    %4 = vector.load %arg3[%c0_2, %c0_3] : memref<8x32xf32, #tpu.memory_space<vmem>>, vector<8x32xf32>
    %cst = arith.constant dense<0.000000e+00> : vector<8x8xf32>
    %5 = tpu.matmul %3, %4, %cst {dimension_numbers = #tpu.dot_dimension_numbers<[1], [1], [0], [0], [0, 0, 1, 0], [], []>} : vector<8x32xf32>, vector<8x32xf32>, vector<8x8xf32> -> vector<8x8xf32>
    %6 = arith.mulf %3, %3 : vector<8x32xf32>
    %cst_4 = arith.constant dense<0.000000e+00> : vector<8xf32>
    %7 = vector.multi_reduction <add>, %6, %cst_4 [1] : vector<8x32xf32> to vector<8xf32>
    %8 = vector.shape_cast %7 : vector<8xf32> to vector<8x1xf32>
    %9 = arith.mulf %4, %4 : vector<8x32xf32>
    %cst_5 = arith.constant dense<0.000000e+00> : vector<8xf32>
    %10 = vector.multi_reduction <add>, %9, %cst_5 [1] : vector<8x32xf32> to vector<8xf32>
    %11 = vector.shape_cast %10 : vector<8xf32> to vector<8x1xf32>
    %12 = tpu.transpose %11, [1, 0] : vector<8x1xf32> -> vector<1x8xf32>
    %13 = vector.broadcast %8 : vector<8x1xf32> to vector<8x8xf32>
    %14 = vector.broadcast %12 : vector<1x8xf32> to vector<8x8xf32>
    %15 = arith.addf %13, %14 : vector<8x8xf32>
    %cst_6 = arith.constant 2.000000e+00 : f32
    %16 = vector.broadcast %cst_6 : f32 to vector<8x8xf32>
    %17 = arith.mulf %16, %5 : vector<8x8xf32>
    %18 = arith.subf %15, %17 : vector<8x8xf32>
    %c0_7 = arith.constant 0 : index
    %c0_8 = arith.constant 0 : index
    %19 = vector.load %arg4[%c0_7, %c0_8] : memref<8x1xi32, #tpu.memory_space<vmem>>, vector<8x1xi32>
    %c0_9 = arith.constant 0 : index
    %c0_10 = arith.constant 0 : index
    %20 = vector.load %arg5[%c0_9, %c0_10] : memref<1x8xi32, #tpu.memory_space<vmem>>, vector<1x8xi32>
    %21 = vector.broadcast %19 : vector<8x1xi32> to vector<8x8xi32>
    %22 = vector.broadcast %20 : vector<1x8xi32> to vector<8x8xi32>
    %23 = arith.cmpi eq, %21, %22 : vector<8x8xi32>
    %24 = tpu.iota {dimensions = array<i32: 1>} : vector<1x8xi32>
    %c8_i32 = arith.constant 8 : i32
    %25 = arith.muli %arg1, %c8_i32 : i32
    %26 = vector.broadcast %25 : i32 to vector<1x8xi32>
    %27 = arith.addi %24, %26 : vector<1x8xi32>
    %c8_i32_11 = arith.constant 8 : i32
    %28 = vector.broadcast %c8_i32_11 : i32 to vector<1x8xi32>
    %29 = arith.cmpi slt, %27, %28 : vector<1x8xi32>
    %30 = vector.broadcast %29 : vector<1x8xi1> to vector<8x8xi1>
    %31 = arith.andi %23, %30 : vector<8x8xi1>
    %cst_12 = arith.constant 0xFF800000 : f32
    %32 = vector.broadcast %cst_12 : f32 to vector<8x8xf32>
    %33 = arith.select %31, %18, %32 : vector<8x8xi1>, vector<8x8xf32>
    %cst_13 = arith.constant dense<true> : vector<8x8xi1>
    %34 = arith.xori %23, %cst_13 : vector<8x8xi1>
    %35 = vector.broadcast %29 : vector<1x8xi1> to vector<8x8xi1>
    %36 = arith.andi %34, %35 : vector<8x8xi1>
    %cst_14 = arith.constant 0x7F800000 : f32
    %37 = vector.broadcast %cst_14 : f32 to vector<8x8xf32>
    %38 = arith.select %36, %18, %37 : vector<8x8xi1>, vector<8x8xf32>
    %c0_15 = arith.constant 0 : index
    %c0_16 = arith.constant 0 : index
    %39 = vector.load %arg8[%c0_15, %c0_16] : memref<8x1xf32, #tpu.memory_space<vmem>>, vector<8x1xf32>
    %cst_17 = arith.constant dense<0xFF800000> : vector<8xf32>
    %40 = vector.multi_reduction <maximumf>, %33, %cst_17 [1] : vector<8x8xf32> to vector<8xf32>
    %41 = vector.shape_cast %40 : vector<8xf32> to vector<8x1xf32>
    %42 = arith.maximumf %39, %41 : vector<8x1xf32>
    %c0_18 = arith.constant 0 : index
    %c0_19 = arith.constant 0 : index
    %43 = vector.load %arg8[%c0_18, %c0_19] : memref<8x1xf32, #tpu.memory_space<vmem>>, vector<8x1xf32>
    tpu.vector_store %arg8[%c0_18, %c0_19], %42 {strides = array<i32>} : memref<8x1xf32, #tpu.memory_space<vmem>>, vector<8x1xf32>,
    %c0_20 = arith.constant 0 : index
    %c0_21 = arith.constant 0 : index
    %44 = vector.load %arg9[%c0_20, %c0_21] : memref<8x1xf32, #tpu.memory_space<vmem>>, vector<8x1xf32>
    %cst_22 = arith.constant dense<0x7F800000> : vector<8xf32>
    %45 = vector.multi_reduction <minimumf>, %38, %cst_22 [1] : vector<8x8xf32> to vector<8xf32>
    %46 = vector.shape_cast %45 : vector<8xf32> to vector<8x1xf32>
    %47 = arith.minimumf %44, %46 : vector<8x1xf32>
    %c0_23 = arith.constant 0 : index
    %c0_24 = arith.constant 0 : index
    %48 = vector.load %arg9[%c0_23, %c0_24] : memref<8x1xf32, #tpu.memory_space<vmem>>, vector<8x1xf32>
    tpu.vector_store %arg9[%c0_23, %c0_24], %47 {strides = array<i32>} : memref<8x1xf32, #tpu.memory_space<vmem>>, vector<8x1xf32>,
    %c0_i32_25 = arith.constant 0 : i32
    %49 = arith.cmpi eq, %arg1, %c0_i32_25 : i32
    %50 = arith.extui %49 : i1 to i32
    %c0_i32_26 = arith.constant 0 : i32
    %51 = arith.cmpi ne, %50, %c0_i32_26 : i32
    scf.if %51 {
      %c0_27 = arith.constant 0 : index
      %c0_28 = arith.constant 0 : index
      %52 = vector.load %arg8[%c0_27, %c0_28] : memref<8x1xf32, #tpu.memory_space<vmem>>, vector<8x1xf32>
      %cst_29 = arith.constant 9.99999996E-13 : f32
      %53 = vector.broadcast %cst_29 : f32 to vector<8x1xf32>
      %54 = arith.maximumf %53, %52 : vector<8x1xf32>
      %55 = math.sqrt %54 : vector<8x1xf32>
      %c0_30 = arith.constant 0 : index
      %c0_31 = arith.constant 0 : index
      %56 = vector.load %arg9[%c0_30, %c0_31] : memref<8x1xf32, #tpu.memory_space<vmem>>, vector<8x1xf32>
      %cst_32 = arith.constant 9.99999996E-13 : f32
      %57 = vector.broadcast %cst_32 : f32 to vector<8x1xf32>
      %58 = arith.maximumf %57, %56 : vector<8x1xf32>
      %59 = math.sqrt %58 : vector<8x1xf32>
      %60 = arith.subf %59, %55 : vector<8x1xf32>
      %cst_33 = arith.constant 0.000000e+00 : f32
      %61 = vector.broadcast %cst_33 : f32 to vector<8x1xf32>
      %62 = arith.subf %61, %60 : vector<8x1xf32>
      %cst_34 = arith.constant 0.000000e+00 : f32
      %63 = vector.broadcast %cst_34 : f32 to vector<8x1xf32>
      %64 = arith.maximumf %63, %62 : vector<8x1xf32>
      %65 = vector.broadcast %cst_34 : f32 to vector<8x1xf32>
      %66 = arith.subf %65, %62 : vector<8x1xf32>
      %67 = arith.cmpf one, %66, %66 : vector<8x1xf32>
      %68 = vector.broadcast %cst_34 : f32 to vector<8x1xf32>
      %69 = arith.addf %68, %62 : vector<8x1xf32>
      %70 = math.absf %66 : vector<8x1xf32>
      %cst_35 = arith.constant 0.000000e+00 : f32
      %71 = vector.broadcast %cst_35 : f32 to vector<8x1xf32>
      %72 = arith.subf %71, %70 : vector<8x1xf32>
      %73 = math.exp %72 : vector<8x1xf32>
      %74 = math.log1p %73 : vector<8x1xf32>
      %75 = arith.addf %64, %74 : vector<8x1xf32>
      %76 = arith.select %67, %69, %75 : vector<8x1xi1>, vector<8x1xf32>
      %77 = tpu.iota {dimensions = array<i32: 0>} : vector<8x1xi32>
      %c8_i32_36 = arith.constant 8 : i32
      %78 = arith.muli %arg0, %c8_i32_36 : i32
      %79 = vector.broadcast %78 : i32 to vector<8x1xi32>
      %80 = arith.addi %77, %79 : vector<8x1xi32>
      %c8_i32_37 = arith.constant 8 : i32
      %81 = vector.broadcast %c8_i32_37 : i32 to vector<8x1xi32>
      %82 = arith.cmpi slt, %80, %81 : vector<8x1xi32>
      %cst_38 = arith.constant 0.000000e+00 : f32
      %83 = vector.broadcast %cst_38 : f32 to vector<8x1xf32>
      %84 = arith.select %82, %76, %83 : vector<8x1xi1>, vector<8x1xf32>
      %c0_39 = arith.constant 0 : index
      %c0_40 = arith.constant 0 : index
      %85 = vector.load %arg6[%c0_39, %c0_40] : memref<8x1xf32, #tpu.memory_space<vmem>>, vector<8x1xf32>
      tpu.vector_store %arg6[%c0_39, %c0_40], %84 {strides = array<i32>} : memref<8x1xf32, #tpu.memory_space<vmem>>, vector<8x1xf32>,
      %86 = arith.cmpf ogt, %59, %55 : vector<8x1xf32>
      %87 = arith.andi %82, %86 : vector<8x1xi1>
      %cst_41 = arith.constant 1.000000e+00 : f32
      %cst_42 = arith.constant 0.000000e+00 : f32
      %88 = vector.broadcast %cst_41 : f32 to vector<8x1xf32>
      %89 = vector.broadcast %cst_42 : f32 to vector<8x1xf32>
      %90 = arith.select %87, %88, %89 : vector<8x1xi1>, vector<8x1xf32>
      %c0_43 = arith.constant 0 : index
      %c0_44 = arith.constant 0 : index
      %91 = vector.load %arg7[%c0_43, %c0_44] : memref<8x1xf32, #tpu.memory_space<vmem>>, vector<8x1xf32>
      tpu.vector_store %arg7[%c0_43, %c0_44], %90 {strides = array<i32>} : memref<8x1xf32, #tpu.memory_space<vmem>>, vector<8x1xf32>,
    } else {
    }
    return
  }
  func.func @transform_0(%arg0: i32, %arg1: i32) -> (i32, i32) {
    %c0_i32 = arith.constant 0 : i32
    %c0_i32_0 = arith.constant 0 : i32
    return %arg0, %c0_i32 : i32, i32
  }
  func.func @transform_1(%arg0: i32, %arg1: i32) -> (i32, i32) {
    %c0_i32 = arith.constant 0 : i32
    %c0_i32_0 = arith.constant 0 : i32
    return %arg1, %c0_i32 : i32, i32
  }
  func.func @transform_2(%arg0: i32, %arg1: i32) -> (i32, i32) {
    %c0_i32 = arith.constant 0 : i32
    %c0_i32_0 = arith.constant 0 : i32
    return %arg0, %c0_i32 : i32, i32
  }
  func.func @transform_3(%arg0: i32, %arg1: i32) -> (i32, i32) {
    %c0_i32 = arith.constant 0 : i32
    %c0_i32_0 = arith.constant 0 : i32
    return %c0_i32, %arg1 : i32, i32
  }
  func.func @transform_4(%arg0: i32, %arg1: i32) -> (i32, i32) {
    %c0_i32 = arith.constant 0 : i32
    %c0_i32_0 = arith.constant 0 : i32
    return %arg0, %c0_i32 : i32, i32
  }
  func.func @transform_5(%arg0: i32, %arg1: i32) -> (i32, i32) {
    %c0_i32 = arith.constant 0 : i32
    %c0_i32_0 = arith.constant 0 : i32
    return %arg0, %c0_i32 : i32, i32
  }
}

</mosaic_0001>

<llo_original>
// kernel: tpu_custom_call.1
$region0: #{tpu_custom_call.1}
  #allocation0 [shape = 'u32[]', space=smem, size = 0x4, offset = 0x4, fixed_abs, tag = 'smem constant byte address 0x4 - core index']
  #allocation1 [shape = 'u32[72,128]{1,0:T(1,128)}', space=vmem, size = 0x9000, scoped, tag = 'internal scratch']
  #allocation2 [shape = 'f32[8,1]{1,0:T(8,128)}', space=vmem, size = 0x1000, scoped, tag = 'scratch operand']
  #allocation3 [shape = 'f32[8,1]{1,0:T(8,128)}', space=vmem, size = 0x1000, scoped, tag = 'scratch operand']
  %s0 = inlined_call_operand.vmem [shape: f32[8,32], index: 0, kind: input, shape index: {}]
  %s1 = inlined_call_operand.hbm [shape: f32[8,32], index: 1, kind: input, shape index: {}]
  %s2 = inlined_call_operand.vmem [shape: s32[8,1], index: 2, kind: input, shape index: {}]
  %s3 = inlined_call_operand.vmem [shape: s32[1,8], index: 3, kind: input, shape index: {}]
  %s4 = inlined_call_operand.vmem [shape: f32[8,1], index: 4, kind: output, shape index: {0}]
  %s5 = inlined_call_operand.vmem [shape: f32[8,1], index: 5, kind: output, shape index: {1}]
  %6 = xla_tuple %s4, %s5
  %s7 = sld [smem:[#allocation0]]
  $region46: #{tpu_custom_call.1} parent=0
    _
  %s9 = ssub.s32 1, %s7
  %s10 = scalar_select 0, %s9, %s7
  $region1: #{tpu_custom_call.1} parent=0
    #allocation4 [shape = 'u8[4096]{0}', space=vmem, size = 0x1000, scoped, tag = 'input window, operand 1, single buffered']
    #allocation5 [shape = 's32[1]{0}', space=sflag, size = 0x4, scoped, tag = 'scoped memory for tpu_custom_call.1']
    %11 = vsyncpa [#allocation5], 0
    // Predicated region
    $region2: #{tpu_custom_call.1} parent=1 // pred_check
      _
    $region3: #{tpu_custom_call.1} parent=1 // pred_check_branch
      %13 = sbr.rel (0) target = $region5
    $region4: #{tpu_custom_call.1} parent=1 // pred_region
      _
    $region5: #{tpu_custom_call.1} parent=1 // pred_fallthru
      _
    // Predicated region
    $region6: #{tpu_custom_call.1} parent=1 // pred_check
      _
    $region7: #{tpu_custom_call.1} parent=1 // pred_check_branch
      %15 = sbr.rel (0) target = $region9
    $region8: #{tpu_custom_call.1} parent=1 // pred_region
      %17 = vsyncadd [#allocation5], 0
      %s19 = sshll.u32 %s1, 4
      %s20 = int_to_ptr.hbm [resolvable:$true] %s19
      %s21 = sshll.u32 [#allocation4], 4
      %s22 = int_to_ptr.vmem [resolvable:$true] %s21
      %24 = dma.hbm_to_vmem [thread:$0]  %s20, 128, %s22, [#allocation5]
    $region9: #{tpu_custom_call.1} parent=1 // pred_fallthru
      _
    // Predicated region
    $region10: #{tpu_custom_call.1} parent=1 // pred_check
      _
    $region11: #{tpu_custom_call.1} parent=1 // pred_check_branch
      %26 = sbr.rel (0) target = $region13
    $region12: #{tpu_custom_call.1} parent=1 // pred_region
      _
    $region13: #{tpu_custom_call.1} parent=1 // pred_fallthru
      _
    // Predicated region
    $region14: #{tpu_custom_call.1} parent=1 // pred_check
      _
    $region15: #{tpu_custom_call.1} parent=1 // pred_check_branch
      %28 = sbr.rel (0) target = $region17
    $region16: #{tpu_custom_call.1} parent=1 // pred_region
      _
    $region17: #{tpu_custom_call.1} parent=1 // pred_fallthru
      _
    // Predicated region
    $region18: #{tpu_custom_call.1} parent=1 // pred_check
      _
    $region19: #{tpu_custom_call.1} parent=1 // pred_check_branch
      %30 = sbr.rel (0) target = $region21
    $region20: #{tpu_custom_call.1} parent=1 // pred_region
      %32 = dma.done [#allocation5], 128
    $region21: #{tpu_custom_call.1} parent=1 // pred_fallthru
      _
    %p33 = scmp.eq.s32.totalorder 0, 0
    // Predicated region
    $region22: #{tpu_custom_call.1} parent=1 // pred_check
      %p34 = pneg %p33
    $region23: #{tpu_custom_call.1} parent=1 // pred_check_branch
      %36 = sbr.rel (%p34) target = $region25
    $region24: #{tpu_custom_call.1} parent=1 // pred_region
      %vm37 = vcmask 7168
      %38 = vst.msk [vmem:[#allocation2] sm:$0xff] %vm37, -inf
      %39 = vst.msk [vmem:[#allocation3] sm:$0xff] %vm37, inf
    $region25: #{tpu_custom_call.1} parent=1 // pred_fallthru
      _
    %v40 = vld [vmem:[%s0] sm:$0xff]
    %v41 = vld [vmem:[#allocation4] sm:$0xff]
    %vm42 = vcmask 261120
    %v44 = vsel %vm42, %v40, 0
    %v47 = vsel %vm42, %v41, 0
    %49 = vmatpush.xpose.msra.mxu0 0.0
    %50 = vmatpush.xpose.msra.mxu0 0.0
    %51 = vmatpush.xpose.msra.mxu0 0.0
    %52 = vmatpush.xpose.msra.mxu0 0.0
    %53 = vmatpush.xpose.msra.mxu0 0.0
    %54 = vmatpush.xpose.msra.mxu0 0.0
    %55 = vmatpush.xpose.msra.mxu0 0.0
    %56 = vmatpush.xpose.msra.mxu0 0.0
    %57 = vmatpush.xpose.msra.mxu0 0.0
    %58 = vmatpush.xpose.msra.mxu0 0.0
    %59 = vmatpush.xpose.msra.mxu0 0.0
    %60 = vmatpush.xpose.msra.mxu0 0.0
    %61 = vmatpush.xpose.msra.mxu0 0.0
    %62 = vmatpush.xpose.msra.mxu0 0.0
    %63 = vmatpush.xpose.msra.mxu0 0.0
    %64 = vmatpush.xpose.msra.mxu0 %v47
    %65 = vmatmul.f32.gmra.mxu0 %v44
    %v66 = vpop.f32.mrf.mxu0
    %v67 = vadd.f32 0.0, %v66
    %68 = vdwg.mxu0
    %v69 = vmul.f32 %v40, %v40
    %v70 = vsel %vm42, %v69, 0.0
    %71 = vadd.xlane.f32.xlu0 %v70
    %v72 = vpop.xlane.xlu0 %71
    %v73 = vmul.f32 %v41, %v41
    %v74 = vsel %vm42, %v73, 0.0
    %75 = vadd.xlane.f32.xlu0 %v74
    %v76 = vpop.xlane.xlu0 %75
    %77 = vxpose.xlu0.b32.start [1/16] %v76, 128
    %78 = vxpose.xlu0.b32.cont [2/16] 0.0, 128
    %79 = vxpose.xlu0.b32.cont [3/16] 0.0, 128
    %80 = vxpose.xlu0.b32.cont [4/16] 0.0, 128
    %81 = vxpose.xlu0.b32.cont [5/16] 0.0, 128
    %82 = vxpose.xlu0.b32.cont [6/16] 0.0, 128
    %83 = vxpose.xlu0.b32.cont [7/16] 0.0, 128
    %84 = vxpose.xlu0.b32.cont [8/16] 0.0, 128
    %85 = vxpose.xlu0.b32.cont [9/16] 0.0, 128
    %86 = vxpose.xlu0.b32.cont [10/16] 0.0, 128
    %87 = vxpose.xlu0.b32.cont [11/16] 0.0, 128
    %88 = vxpose.xlu0.b32.cont [12/16] 0.0, 128
    %89 = vxpose.xlu0.b32.cont [13/16] 0.0, 128
    %90 = vxpose.xlu0.b32.cont [14/16] 0.0, 128
    %91 = vxpose.xlu0.b32.cont [15/16] 0.0, 128
    %92 = vxpose.xlu0.b32.end [16/16] 0.0, 128
    %v93 = vpop.trf.xlu0
    %v94 = vpop.trf.xlu0
    %v95 = vpop.trf.xlu0
    %v96 = vpop.trf.xlu0
    %v97 = vpop.trf.xlu0
    %v98 = vpop.trf.xlu0
    %v99 = vpop.trf.xlu0
    %v100 = vpop.trf.xlu0
    %v101 = vpop.trf.xlu0
    %v102 = vpop.trf.xlu0
    %v103 = vpop.trf.xlu0
    %v104 = vpop.trf.xlu0
    %v105 = vpop.trf.xlu0
    %v106 = vpop.trf.xlu0
    %v107 = vpop.trf.xlu0
    %v108 = vpop.trf.xlu0
    %v109 = vperm.slane %v93, 0
    %v110 = vadd.f32 %v72, %v109
    %v111 = vmul.f32 %v67, 2.0
    %v112 = vsub.f32 %v110, %v111
    %v113 = vld [vmem:[%s2] sm:$0xff]
    %v114 = vld [vmem:[%s3] sm:$0x1]
    %115 = vset.pattern.permute.xlu0 0
    %116 = vperm.xlu0 %115, %v113
    %v117 = vpop.permute.xlu0 %116
    %v118 = vperm.slane %v114, 0
    %vm119 = vcmp.eq.s32.totalorder %v117, %v118
    %v120 = vlaneseq
    %v121 = vand.u32 %v120, 127
    %s122 = smul.u32 0, 8
    %v123 = vstv %s122
    %v124 = vadd.s32 %v121, %v123
    %vm125 = vcmp.lt.s32.totalorder %v124, 8
    %v126 = vsel %vm125, 1, 0
    %vm127 = vcmp.eq.s32.totalorder %v126, 1
    %vm128 = vmand %vm119, %vm127
    %v129 = vsel %vm128, %v112, -inf
    %vm130 = vmxor %vm119, 1
    %vm131 = vmand %vm130, %vm127
    %v132 = vsel %vm131, %v112, inf
    %v133 = vld [vmem:[#allocation2] sm:$0xff]
    %vm134 = vcmask 64512
    %v135 = vsel %vm134, %v129, -inf
    %136 = vmax.xlane.f32.xlu0 %v135
    %v137 = vpop.xlane.xlu0 %136
    %v138 = vmax.f32 %v133, %v137
    %vm139 = vcmask 7168
    %140 = vst.msk [vmem:[#allocation2] sm:$0xff] %vm139, %v138
    %v141 = vld [vmem:[#allocation3] sm:$0xff]
    %v142 = vsel %vm134, %v132, inf
    %143 = vmin.xlane.f32.xlu0 %v142
    %v144 = vpop.xlane.xlu0 %143
    %v145 = vmin.f32 %v141, %v144
    %146 = vst.msk [vmem:[#allocation3] sm:$0xff] %vm139, %v145
    // Predicated region
    $region26: #{tpu_custom_call.1} parent=1 // pred_check
      %p147 = pneg %p33
    $region27: #{tpu_custom_call.1} parent=1 // pred_check_branch
      %149 = sbr.rel (%p147) target = $region29
    $region28: #{tpu_custom_call.1} parent=1 // pred_region
      %v150 = vld [vmem:[#allocation2] sm:$0xff]
      %v151 = vmax.f32 %v150, 1e-12
      %v152 = vrsqrt.pop %v151
      %v153 = vmul.f32 %v152, %v151
      %v154 = vmul.f32 %v153, %v152
      %v155 = vmul.f32 0.5, %v154
      %v156 = vsub.f32 1.5, %v155
      %v157 = vmul.f32 %v152, %v156
      %v158 = vmul.f32 %v151, %v157
      %vm159 = vcmp.eq.f32.partialorder %v151, inf
      %v160 = vsel %vm159, %v151, %v158
      %vm161 = vcmp.eq.f32.partialorder %v151, 0.0
      %v162 = vand.u32 %v151, 2147483648
      %v163 = vsel %vm161, %v162, %v160
      %v164 = vld [vmem:[#allocation3] sm:$0xff]
      %v165 = vmax.f32 %v164, 1e-12
      %v166 = vrsqrt.pop %v165
      %v167 = vmul.f32 %v166, %v165
      %v168 = vmul.f32 %v167, %v166
      %v169 = vmul.f32 0.5, %v168
      %v170 = vsub.f32 1.5, %v169
      %v171 = vmul.f32 %v166, %v170
      %v172 = vmul.f32 %v165, %v171
      %vm173 = vcmp.eq.f32.partialorder %v165, inf
      %v174 = vsel %vm173, %v165, %v172
      %vm175 = vcmp.eq.f32.partialorder %v165, 0.0
      %v176 = vand.u32 %v165, 2147483648
      %v177 = vsel %vm175, %v176, %v174
      %v178 = vsub.f32 %v177, %v163
      %v179 = vsub.f32 0.0, %v178
      %v180 = vmax.f32 %v179, 0.0
      %v181 = vsub.f32 0.0, %v179
      %vm182 = vcmp.ne.f32.partialorder %v181, %v181
      %v183 = vadd.f32 %v179, 0.0
      %v184 = vand.u32 2147483647, %v181
      %v185 = vsub.f32 0.0, %v184
      %v186 = vmul.f32 %v185, 1.442695
      %v187 = vpow.pop %v186
      %v188 = vadd.f32 %v187, 1.0
      %v189 = vlog2.pop %v188
      %v190 = vmul.f32 %v189, 0.6931472
      %v191 = vmul.f32 -0.5, %v187
      %v192 = vadd.f32 %v191, 1.0
      %v193 = vmul.f32 %v192, %v187
      %v194 = vand.u32 2147483647, %v187
      %vm195 = vcmp.lt.f32.partialorder %v194, 0.0004427343
      %v196 = vsel %vm195, %v193, %v190
      %v197 = vadd.f32 %v180, %v196
      %v198 = vsel %vm182, %v183, %v197
      %v199 = vlaneseq
      %v200 = vshrl.u32 %v199, 7
      %s201 = smul.u32 0, 8
      %v202 = vstv %s201
      %v203 = vadd.s32 %v200, %v202
      %vm204 = vcmp.lt.s32.totalorder %v203, 8
      %v205 = vsel %vm204, %v198, 0.0
      %206 = vst.msk [vmem:[%s4] sm:$0xff] %vm139, %v205
      %vm207 = vcmp.gt.f32.partialorder %v177, %v163
      %vm208 = vmand %vm204, %vm207
      %v209 = vsel %vm208, 1.0, 0.0
      %210 = vst.msk [vmem:[%s5] sm:$0xff] %vm139, %v209
    $region29: #{tpu_custom_call.1} parent=1 // pred_fallthru
      _
    // Predicated region
    $region30: #{tpu_custom_call.1} parent=1 // pred_check
      _
    $region31: #{tpu_custom_call.1} parent=1 // pred_check_branch
      %212 = sbr.rel (0) target = $region33
    $region32: #{tpu_custom_call.1} parent=1 // pred_region
      _
    $region33: #{tpu_custom_call.1} parent=1 // pred_fallthru
      _
    // Predicated region
    $region34: #{tpu_custom_call.1} parent=1 // pred_check
      _
    $region35: #{tpu_custom_call.1} parent=1 // pred_check_branch
      %214 = sbr.rel (0) target = $region37
    $region36: #{tpu_custom_call.1} parent=1 // pred_region
      _
    $region37: #{tpu_custom_call.1} parent=1 // pred_fallthru
      _
    // Predicated region
    $region38: #{tpu_custom_call.1} parent=1 // pred_check
      _
    $region39: #{tpu_custom_call.1} parent=1 // pred_check_branch
      %216 = sbr.rel (0) target = $region41
    $region40: #{tpu_custom_call.1} parent=1 // pred_region
      _
    $region41: #{tpu_custom_call.1} parent=1 // pred_fallthru
      _
    // Predicated region
    $region42: #{tpu_custom_call.1} parent=1 // pred_check
      _
    $region43: #{tpu_custom_call.1} parent=1 // pred_check_branch
      %218 = sbr.rel (0) target = $region45
    $region44: #{tpu_custom_call.1} parent=1 // pred_region
      _
    $region45: #{tpu_custom_call.1} parent=1 // pred_fallthru
      _
    %219 = vsyncpa [#allocation5], 1

</llo_original>
